<compile_context>
chip_gen: v7x
topology: tpu7x:2x2x1
jax: 0.10.0
libtpu: 0.0.40
codegen_flags: <defaults>
</compile_context>

<pallas_src>
import functools

import jax
import jax.numpy as jnp
import numpy as np
from jax.experimental import pallas as pl
from jax.experimental.pallas import tpu as pltpu

NEG_FILL = -1e30  # matches x.new_full((nb, npos), -1e30) in the PyTorch code


def _flipflop_recurrence_kernel(stay_ref, move_ref, out_ref, *, tt, unroll):
    """One grid step == TT time steps of the flip-flop forward recursion.

    stay_ref : (TT, TB, npos)  pre-gathered stay scores (sharp folded in)
    move_ref : (TT, TB, npos)  pre-gathered, pre-SHIFTED move scores
                               (move_ref[t, :, p] == move_score[t, :, p-1])
    out_ref  : (TB, npos)      forward lattice; VMEM-resident across the time
                               grid axis (same output block for every t).
    """
    t_blk = pl.program_id(1)

    # fwd = full(-1e30); fwd[:, 0] = 0.0   (once per batch block)
    @pl.when(t_blk == 0)
    def _():
        col = jax.lax.broadcasted_iota(jnp.int32, out_ref.shape, 1)
        out_ref[...] = jnp.where(col == 0, 0.0, NEG_FILL).astype(out_ref.dtype)

    # Hoisted out of the serial inner loop: additive mask that kills the move
    # branch at position 0 (reproduces `score[:, 0] = stay + prev[:, 0]`).
    col = jax.lax.broadcasted_iota(jnp.int32, out_ref.shape, 1)
    neg_mask = jnp.where(col == 0, NEG_FILL, 0.0).astype(jnp.float32)

    def body(i, fwd):
        stay = stay_ref[i]                                   # (TB, npos)
        move = move_ref[i]                                   # (TB, npos), pre-shifted
        shifted_prev = pltpu.roll(fwd, shift=1, axis=1) + neg_mask
        return jnp.logaddexp(stay + fwd, move + shifted_prev)

    fwd = jax.lax.fori_loop(0, tt, body, out_ref[...], unroll=unroll)
    out_ref[...] = fwd


def flipflop_loss(x, move_idx, stay_idx, seqlens, sharp=1.0, *, tt=None, tb=None):
    """Pallas implementation of FlipFlopLoss.forward.

    x        : (nt, nb, 40) float (any float dtype; recurrence runs in f32)
    move_idx : (nb, npos-1) int32
    stay_idx : (nb, npos)   int32
    seqlens  : (nb,)        int32
    returns  : (nb, 1) float32  loss == -fwd[b, seqlens[b]-1] / (sharp * nt)
    """
    nt, nb, nf = x.shape
    nb_stay, npos = stay_idx.shape
    nb_move, npos_move = move_idx.shape
    assert nf == 40, "Flip-flop requires 40 features, got {}".format(nf)
    assert nb_stay == nb and nb_move == nb
    assert seqlens.shape[0] == nb
    assert npos == npos_move + 1

    # ---- time-parallel gather (MXU via XLA), off the serial critical path ----
    # sharp is folded into the one-hot constants so the kernel never multiplies
    # by it.  x is consumed in its native dtype by the einsum; accumulation and
    # everything downstream is f32.
    stay_oh = jax.nn.one_hot(stay_idx, nf, dtype=jnp.float32) * float(sharp)   # (nb, npos, nf)
    move_oh = jax.nn.one_hot(move_idx, nf, dtype=jnp.float32) * float(sharp)   # (nb, npos-1, nf)
    stay_x = jnp.einsum("tbf,bpf->tbp", x, stay_oh,
                        preferred_element_type=jnp.float32)                    # (nt, nb, npos)
    move_x = jnp.einsum("tbf,bpf->tbp", x, move_oh,
                        preferred_element_type=jnp.float32)                    # (nt, nb, npos-1)
    # Pre-shift the move scores by one position so the kernel needs only ONE
    # roll (on prev) per step: move_shift[:, :, p] = move_x[:, :, p-1], p >= 1.
    move_shift = jnp.pad(move_x, ((0, 0), (0, 0), (1, 0)))                     # (nt, nb, npos)

    # ---- time blocking (+ identity-step padding for partial blocks) ----
    if tt is None:
        tt = min(nt, 128)
    tt = max(1, min(tt, nt))
    nt_pad = pl.cdiv(nt, tt) * tt
    if nt_pad != nt:
        # Identity steps: stay = 0, move = -1e30  =>  fwd unchanged (in f32).
        stay_x = jnp.pad(stay_x, ((0, nt_pad - nt), (0, 0), (0, 0)))
        move_shift = jnp.pad(move_shift, ((0, nt_pad - nt), (0, 0), (0, 0)),
                             constant_values=NEG_FILL)
    nt_blocks = nt_pad // tt

    # ---- batch blocking (parallel grid axis; ~2x on v7x dual TensorCore) ----
    if tb is None:
        tb = nb
    if nb % tb != 0 or (tb != nb and tb % 8 != 0):
        tb = nb  # fall back to a single batch block if the request is awkward
    nb_blocks = nb // tb

    # unroll the inner serial loop a little (keep it a divisor of tt)
    unroll = 4 if tt % 4 == 0 else (2 if tt % 2 == 0 else 1)

    # VMEM budget: 2 inputs x 2 pipeline buffers x one (tt, tb, npos) f32 slab
    # plus the resident output block (important on v5e's 16 MiB default limit).
    def _ru(v, m):
        return (v + m - 1) // m * m
    slab = tt * _ru(tb, 8) * _ru(npos, 128) * 4
    need = 2 * 2 * slab + 2 * _ru(tb, 8) * _ru(npos, 128) * 4 + (1 << 20)
    vmem_limit = int(min(max(int(need * 1.25), 16 * 2**20), 32 * 2**20))

    kernel = functools.partial(_flipflop_recurrence_kernel, tt=tt, unroll=unroll)

    fwd = pl.pallas_call(
        kernel,
        out_shape=jax.ShapeDtypeStruct((nb, npos), jnp.float32),
        grid_spec=pltpu.PrefetchScalarGridSpec(
            num_scalar_prefetch=0,
            grid=(nb_blocks, nt_blocks),
            in_specs=[
                pl.BlockSpec((tt, tb, npos), lambda b, t: (t, b, 0)),
                pl.BlockSpec((tt, tb, npos), lambda b, t: (t, b, 0)),
            ],
            # Same block for every time index -> stays VMEM-resident across the
            # recurrence, written back to HBM once per batch block.
            out_specs=pl.BlockSpec((tb, npos), lambda b, t: (b, 0)),
        ),
        compiler_params=pltpu.CompilerParams(
            dimension_semantics=("parallel", "arbitrary"),
            vmem_limit_bytes=vmem_limit,
        ),
    )(stay_x, move_shift)

    # Tiny XLA glue: final gather at seqlens-1 and normalisation.
    return -jnp.take_along_axis(fwd, seqlens[:, None] - 1, axis=1) / (float(sharp) * nt)


def flipflop_loss_ref(x, move_idx, stay_idx, seqlens, sharp=1.0):
    """Pure-JAX reference mirroring the PyTorch forward, for verification."""
    nt, nb, nf = x.shape
    npos = stay_idx.shape[1]
    fwd0 = jnp.full((nb, npos), NEG_FILL, jnp.float32).at[:, 0].set(0.0)

    def step(fwd, xt):
        xt = xt.astype(jnp.float32) * sharp
        score = jnp.take_along_axis(xt, stay_idx, axis=1) + fwd
        move_score = jnp.take_along_axis(xt, move_idx, axis=1) + fwd[:, :-1]
        score = score.at[:, 1:].set(jnp.logaddexp(move_score, score[:, 1:]))
        return score, None

    fwd, _ = jax.lax.scan(step, fwd0, x)
    return -jnp.take_along_axis(fwd, seqlens[:, None] - 1, axis=1) / (sharp * nt)


if __name__ == "__main__":
    nt, nb, nf = 8, 4, 40     # time, batch, flip-flop features (must be 40)
    npos = 9                  # stay positions; move positions = npos - 1
    sharp = 1.0

    key = jax.random.PRNGKey(0)
    kx, km, ks, kl = jax.random.split(key, 4)

    x = jax.random.normal(kx, (nt, nb, nf), dtype=jnp.float32)
    move_idx = jax.random.randint(km, (nb, npos - 1), 0, nf, dtype=jnp.int32)
    stay_idx = jax.random.randint(ks, (nb, npos), 0, nf, dtype=jnp.int32)
    seqlens = jax.random.randint(kl, (nb,), 1, npos + 1, dtype=jnp.int32)

    # tt=4 exercises time blocking (2 time blocks) at these small shapes.
    loss = flipflop_loss(x, move_idx, stay_idx, seqlens, sharp=sharp, tt=4)
    loss = jax.block_until_ready(loss)

    loss_ref = jax.block_until_ready(
        flipflop_loss_ref(x, move_idx, stay_idx, seqlens, sharp=sharp)
    )

    assert loss.shape == (nb, 1)
    np.testing.assert_allclose(np.asarray(loss), np.asarray(loss_ref),
                               rtol=1e-5, atol=1e-5)
    print("KERNEL_OK")
</pallas_src>

<mosaic_0001>
module attributes {stable_mosaic.version = 11 : i64} {
  func.func @_flipflop_recurrence_kernel(%arg0: i32, %arg1: i32, %arg2: memref<4x4x9xf32, #tpu.memory_space<vmem>>, %arg3: memref<4x4x9xf32, #tpu.memory_space<vmem>>, %arg4: memref<4x9xf32, #tpu.memory_space<vmem>>) attributes {dimension_semantics = [#tpu.dimension_semantics<parallel>, #tpu.dimension_semantics<arbitrary>], iteration_bounds = array<i64: 1, 2>, scalar_prefetch = 0 : i64, scratch_operands = 0 : i64, tpu.core_type = #tpu.core_type<tc>, window_params = [{transform_indices = @transform_0, window_bounds = array<i64: 4, 4, 9>}, {transform_indices = @transform_1, window_bounds = array<i64: 4, 4, 9>}, {transform_indices = @transform_2, window_bounds = array<i64: 4, 9>}]} {
    %c0_i32 = arith.constant 0 : i32
    %0 = arith.cmpi eq, %arg1, %c0_i32 : i32
    %1 = arith.extui %0 : i1 to i32
    %c0_i32_0 = arith.constant 0 : i32
    %2 = arith.cmpi ne, %1, %c0_i32_0 : i32
    scf.if %2 {
      %95 = tpu.iota {dimensions = array<i32: 1>} : vector<4x9xi32>
      %c0_i32_31 = arith.constant 0 : i32
      %96 = vector.broadcast %c0_i32_31 : i32 to vector<4x9xi32>
      %97 = arith.cmpi eq, %95, %96 : vector<4x9xi32>
      %cst_32 = arith.constant 0.000000e+00 : f32
      %cst_33 = arith.constant -1.000000e+30 : f32
      %98 = vector.broadcast %cst_32 : f32 to vector<4x9xf32>
      %99 = vector.broadcast %cst_33 : f32 to vector<4x9xf32>
      %100 = arith.select %97, %98, %99 : vector<4x9xi1>, vector<4x9xf32>
      %c0_34 = arith.constant 0 : index
      %c0_35 = arith.constant 0 : index
      %101 = vector.load %arg4[%c0_34, %c0_35] : memref<4x9xf32, #tpu.memory_space<vmem>>, vector<4x9xf32>
      tpu.vector_store %arg4[%c0_34, %c0_35], %100 {strides = array<i32>} : memref<4x9xf32, #tpu.memory_space<vmem>>, vector<4x9xf32>,
    } else {
    }
    %3 = tpu.iota {dimensions = array<i32: 1>} : vector<4x9xi32>
    %c0_i32_1 = arith.constant 0 : i32
    %4 = vector.broadcast %c0_i32_1 : i32 to vector<4x9xi32>
    %5 = arith.cmpi eq, %3, %4 : vector<4x9xi32>
    %cst = arith.constant -1.000000e+30 : f32
    %cst_2 = arith.constant 0.000000e+00 : f32
    %6 = vector.broadcast %cst : f32 to vector<4x9xf32>
    %7 = vector.broadcast %cst_2 : f32 to vector<4x9xf32>
    %8 = arith.select %5, %6, %7 : vector<4x9xi1>, vector<4x9xf32>
    %c0 = arith.constant 0 : index
    %c0_3 = arith.constant 0 : index
    %9 = vector.load %arg4[%c0, %c0_3] : memref<4x9xf32, #tpu.memory_space<vmem>>, vector<4x9xf32>
    %c0_i32_4 = arith.constant 0 : i32
    %10 = arith.index_cast %c0_i32_4 : i32 to index
    %c0_5 = arith.constant 0 : index
    %c0_6 = arith.constant 0 : index
    %11 = vector.load %arg2[%10, %c0_5, %c0_6] : memref<4x4x9xf32, #tpu.memory_space<vmem>>, vector<1x4x9xf32>
    %12 = vector.shape_cast %11 : vector<1x4x9xf32> to vector<4x9xf32>
    %13 = arith.index_cast %c0_i32_4 : i32 to index
    %c0_7 = arith.constant 0 : index
    %c0_8 = arith.constant 0 : index
    %14 = vector.load %arg3[%13, %c0_7, %c0_8] : memref<4x4x9xf32, #tpu.memory_space<vmem>>, vector<1x4x9xf32>
    %15 = vector.shape_cast %14 : vector<1x4x9xf32> to vector<4x9xf32>
    %c1_i32 = arith.constant 1 : i32
    %16 = tpu.dynamic_rotate %9 by %c1_i32 dim 1 : vector<4x9xf32>, i32 -> vector<4x9xf32>
    %17 = arith.addf %16, %8 : vector<4x9xf32>
    %18 = arith.addf %12, %9 : vector<4x9xf32>
    %19 = arith.addf %15, %17 : vector<4x9xf32>
    %20 = arith.maximumf %18, %19 : vector<4x9xf32>
    %21 = arith.subf %18, %19 : vector<4x9xf32>
    %22 = arith.cmpf one, %21, %21 : vector<4x9xf32>
    %23 = arith.addf %18, %19 : vector<4x9xf32>
    %24 = math.absf %21 : vector<4x9xf32>
    %cst_9 = arith.constant 0.000000e+00 : f32
    %25 = vector.broadcast %cst_9 : f32 to vector<4x9xf32>
    %26 = arith.subf %25, %24 : vector<4x9xf32>
    %27 = math.exp %26 : vector<4x9xf32>
    %28 = math.log1p %27 : vector<4x9xf32>
    %29 = arith.addf %20, %28 : vector<4x9xf32>
    %30 = arith.select %22, %23, %29 : vector<4x9xi1>, vector<4x9xf32>
    %c1_i32_10 = arith.constant 1 : i32
    %31 = arith.index_cast %c1_i32_10 : i32 to index
    %c0_11 = arith.constant 0 : index
    %c0_12 = arith.constant 0 : index
    %32 = vector.load %arg2[%31, %c0_11, %c0_12] : memref<4x4x9xf32, #tpu.memory_space<vmem>>, vector<1x4x9xf32>
    %33 = vector.shape_cast %32 : vector<1x4x9xf32> to vector<4x9xf32>
    %34 = arith.index_cast %c1_i32_10 : i32 to index
    %c0_13 = arith.constant 0 : index
    %c0_14 = arith.constant 0 : index
    %35 = vector.load %arg3[%34, %c0_13, %c0_14] : memref<4x4x9xf32, #tpu.memory_space<vmem>>, vector<1x4x9xf32>
    %36 = vector.shape_cast %35 : vector<1x4x9xf32> to vector<4x9xf32>
    %c1_i32_15 = arith.constant 1 : i32
    %37 = tpu.dynamic_rotate %30 by %c1_i32_15 dim 1 : vector<4x9xf32>, i32 -> vector<4x9xf32>
    %38 = arith.addf %37, %8 : vector<4x9xf32>
    %39 = arith.addf %33, %30 : vector<4x9xf32>
    %40 = arith.addf %36, %38 : vector<4x9xf32>
    %41 = arith.maximumf %39, %40 : vector<4x9xf32>
    %42 = arith.subf %39, %40 : vector<4x9xf32>
    %43 = arith.cmpf one, %42, %42 : vector<4x9xf32>
    %44 = arith.addf %39, %40 : vector<4x9xf32>
    %45 = math.absf %42 : vector<4x9xf32>
    %cst_16 = arith.constant 0.000000e+00 : f32
    %46 = vector.broadcast %cst_16 : f32 to vector<4x9xf32>
    %47 = arith.subf %46, %45 : vector<4x9xf32>
    %48 = math.exp %47 : vector<4x9xf32>
    %49 = math.log1p %48 : vector<4x9xf32>
    %50 = arith.addf %41, %49 : vector<4x9xf32>
    %51 = arith.select %43, %44, %50 : vector<4x9xi1>, vector<4x9xf32>
    %c2_i32 = arith.constant 2 : i32
    %52 = arith.index_cast %c2_i32 : i32 to index
    %c0_17 = arith.constant 0 : index
    %c0_18 = arith.constant 0 : index
    %53 = vector.load %arg2[%52, %c0_17, %c0_18] : memref<4x4x9xf32, #tpu.memory_space<vmem>>, vector<1x4x9xf32>
    %54 = vector.shape_cast %53 : vector<1x4x9xf32> to vector<4x9xf32>
    %55 = arith.index_cast %c2_i32 : i32 to index
    %c0_19 = arith.constant 0 : index
    %c0_20 = arith.constant 0 : index
    %56 = vector.load %arg3[%55, %c0_19, %c0_20] : memref<4x4x9xf32, #tpu.memory_space<vmem>>, vector<1x4x9xf32>
    %57 = vector.shape_cast %56 : vector<1x4x9xf32> to vector<4x9xf32>
    %c1_i32_21 = arith.constant 1 : i32
    %58 = tpu.dynamic_rotate %51 by %c1_i32_21 dim 1 : vector<4x9xf32>, i32 -> vector<4x9xf32>
    %59 = arith.addf %58, %8 : vector<4x9xf32>
    %60 = arith.addf %54, %51 : vector<4x9xf32>
    %61 = arith.addf %57, %59 : vector<4x9xf32>
    %62 = arith.maximumf %60, %61 : vector<4x9xf32>
    %63 = arith.subf %60, %61 : vector<4x9xf32>
    %64 = arith.cmpf one, %63, %63 : vector<4x9xf32>
    %65 = arith.addf %60, %61 : vector<4x9xf32>
    %66 = math.absf %63 : vector<4x9xf32>
    %cst_22 = arith.constant 0.000000e+00 : f32
    %67 = vector.broadcast %cst_22 : f32 to vector<4x9xf32>
    %68 = arith.subf %67, %66 : vector<4x9xf32>
    %69 = math.exp %68 : vector<4x9xf32>
    %70 = math.log1p %69 : vector<4x9xf32>
    %71 = arith.addf %62, %70 : vector<4x9xf32>
    %72 = arith.select %64, %65, %71 : vector<4x9xi1>, vector<4x9xf32>
    %c3_i32 = arith.constant 3 : i32
    %73 = arith.index_cast %c3_i32 : i32 to index
    %c0_23 = arith.constant 0 : index
    %c0_24 = arith.constant 0 : index
    %74 = vector.load %arg2[%73, %c0_23, %c0_24] : memref<4x4x9xf32, #tpu.memory_space<vmem>>, vector<1x4x9xf32>
    %75 = vector.shape_cast %74 : vector<1x4x9xf32> to vector<4x9xf32>
    %76 = arith.index_cast %c3_i32 : i32 to index
    %c0_25 = arith.constant 0 : index
    %c0_26 = arith.constant 0 : index
    %77 = vector.load %arg3[%76, %c0_25, %c0_26] : memref<4x4x9xf32, #tpu.memory_space<vmem>>, vector<1x4x9xf32>
    %78 = vector.shape_cast %77 : vector<1x4x9xf32> to vector<4x9xf32>
    %c1_i32_27 = arith.constant 1 : i32
    %79 = tpu.dynamic_rotate %72 by %c1_i32_27 dim 1 : vector<4x9xf32>, i32 -> vector<4x9xf32>
    %80 = arith.addf %79, %8 : vector<4x9xf32>
    %81 = arith.addf %75, %72 : vector<4x9xf32>
    %82 = arith.addf %78, %80 : vector<4x9xf32>
    %83 = arith.maximumf %81, %82 : vector<4x9xf32>
    %84 = arith.subf %81, %82 : vector<4x9xf32>
    %85 = arith.cmpf one, %84, %84 : vector<4x9xf32>
    %86 = arith.addf %81, %82 : vector<4x9xf32>
    %87 = math.absf %84 : vector<4x9xf32>
    %cst_28 = arith.constant 0.000000e+00 : f32
    %88 = vector.broadcast %cst_28 : f32 to vector<4x9xf32>
    %89 = arith.subf %88, %87 : vector<4x9xf32>
    %90 = math.exp %89 : vector<4x9xf32>
    %91 = math.log1p %90 : vector<4x9xf32>
    %92 = arith.addf %83, %91 : vector<4x9xf32>
    %93 = arith.select %85, %86, %92 : vector<4x9xi1>, vector<4x9xf32>
    %c4_i32 = arith.constant 4 : i32
    %c0_29 = arith.constant 0 : index
    %c0_30 = arith.constant 0 : index
    %94 = vector.load %arg4[%c0_29, %c0_30] : memref<4x9xf32, #tpu.memory_space<vmem>>, vector<4x9xf32>
    tpu.vector_store %arg4[%c0_29, %c0_30], %93 {strides = array<i32>} : memref<4x9xf32, #tpu.memory_space<vmem>>, vector<4x9xf32>,
    return
  }
  func.func @transform_0(%arg0: i32, %arg1: i32) -> (i32, i32, i32) {
    %c0_i32 = arith.constant 0 : i32
    %c0_i32_0 = arith.constant 0 : i32
    return %arg1, %arg0, %c0_i32 : i32, i32, i32
  }
  func.func @transform_1(%arg0: i32, %arg1: i32) -> (i32, i32, i32) {
    %c0_i32 = arith.constant 0 : i32
    %c0_i32_0 = arith.constant 0 : i32
    return %arg1, %arg0, %c0_i32 : i32, i32, i32
  }
  func.func @transform_2(%arg0: i32, %arg1: i32) -> (i32, i32) {
    %c0_i32 = arith.constant 0 : i32
    %c0_i32_0 = arith.constant 0 : i32
    return %arg0, %c0_i32 : i32, i32
  }
}

</mosaic_0001>

<llo_original>
// kernel: tpu_custom_call.1
$region0: #{tpu_custom_call.1}
  #allocation0 [shape = 'u32[]', space=smem, size = 0x4, offset = 0x4, fixed_abs, tag = 'smem constant byte address 0x4 - core index']
  #allocation1 [shape = 'u32[144,128]{1,0:T(1,128)}', space=vmem, size = 0x12000, scoped, tag = 'internal scratch']
  %s0 = inlined_call_operand.hbm [shape: f32[8,4,9], index: 0, kind: input, shape index: {}]
  %s1 = inlined_call_operand.hbm [shape: f32[8,4,9], index: 1, kind: input, shape index: {}]
  %s2 = inlined_call_operand.hbm [shape: f32[4,9], index: 2, kind: output, shape index: {}]
  %s3 = sld [smem:[#allocation0]]
  $region53: #{tpu_custom_call.1} parent=0
    _
  %s5 = ssub.s32 1, %s3
  %s6 = scalar_select 0, %s5, %s3
  $region1: #{tpu_custom_call.1} parent=0
    #allocation2 [shape = 'u8[16384]{0}', space=vmem, size = 0x4000, scoped, tag = 'input window, operand 0']
    #allocation3 [shape = 's32[2]{0}', space=sflag, size = 0x8, scoped, tag = 'scoped memory for tpu_custom_call.1']
    #allocation4 [shape = 's32[2]{0}', space=sflag, size = 0x8, scoped, tag = 'scoped memory for tpu_custom_call.1']
    #allocation5 [shape = 'u8[16384]{0}', space=vmem, size = 0x4000, scoped, tag = 'input window, operand 1']
    #allocation6 [shape = 's32[2]{0}', space=sflag, size = 0x8, scoped, tag = 'scoped memory for tpu_custom_call.1']
    #allocation7 [shape = 'u8[2048]{0}', space=vmem, size = 0x800, scoped, tag = 'output window, operand 0, single buffered']
    %7 = vsyncpa [#allocation3], 0
    %s8 = scalar_lea.sflag [#allocation3], 1
    %9 = vsyncpa %s8, 0
    %10 = vsyncpa [#allocation6], 0
    %s11 = scalar_lea.sflag [#allocation6], 1
    %12 = vsyncpa %s11, 0
    %13 = vsyncpa [#allocation4], 0
    loop: start=0, step=1, limit=4
    $region2: #{tpu_custom_call.1} parent=1 // loop_pre_header
      _
    $region3: #{tpu_custom_call.1} parent=1 // loop_header
      %s15 = sphi 0, %s19
      %p16 = scmp.ge.s32.totalorder %s15, 4
      %s22 = sphi 0, %s34
      %s23 = sphi 0, %s30
      %s24 = sphi 0, %s22
      %s25 = sphi 0, %s23
      %s26 = sphi 0, %s24
      %s27 = sphi 0, %s25
      %s39 = sphi 0, %s41
      %s42 = sphi 0, %s39
      %s43 = sphi 0, %s42
      %s59 = sphi 0, %s43
      %s67 = sphi 0, %s69
      %s70 = sphi 0, %s67
      %s71 = sphi 0, %s70
      %s87 = sphi 0, %s71
      %s93 = sphi 0, %s95
      %s96 = sphi 0, %s93
      %s97 = sphi 0, %s96
      %s113 = sphi 0, %s97
    $region4: #{tpu_custom_call.1} parent=1 // loop_header_branch
      %18 = sbr.rel (%p16) target = $region8
    $region5: #{tpu_custom_call.1} parent=1 // loop_body
      %s20 = ssub.s32 %s15, 1
      %s21 = ssub.s32 %s15, 2
      %s28 = sadd.s32 1, %s23
      %p29 = scmp.ge.s32.totalorder %s28, 2
      %s30 = scalar_select %p29, 0, %s28
      %s31 = sadd.s32 1, %s22
      %s32 = scalar_select %p29, %s31, %s22
      %p33 = scmp.ge.s32.totalorder %s32, 1
      %s34 = scalar_select %p33, 0, %s32
      %s35 = ssub.s32 %s23, %s30
      %s36 = ssub.s32 %s22, %s34
      %s37 = sor.u32 %s35, %s36
      %p38 = scmp.eq.s32.totalorder %s37, 0
      %s40 = sadd.s32 %s39, 1
      %s41 = scalar_select %p38, %s39, %s40
      %p44 = pneg %p38
      %p45 = scmp.eq.s32.totalorder %s15, 1
      %p46 = por %p44, %p45
      %p47 = scmp.ne.s32.totalorder %s39, %s42
      %p48 = scmp.eq.s32.totalorder %s15, 0
      %p49 = por %p47, %p48
      %p50 = scmp.ne.s32.totalorder %s39, %s42
      %p51 = scmp.eq.s32.totalorder %s20, 1
      %p52 = por %p50, %p51
      %p53 = scmp.ne.s32.totalorder %s42, %s43
      %p54 = scmp.eq.s32.totalorder %s20, 0
      %p55 = por %p53, %p54
      %p56 = scmp.ne.s32.totalorder %s42, %s43
      %p57 = scmp.eq.s32.totalorder %s21, 1
      %p58 = por %p56, %p57
      %p60 = scmp.ne.s32.totalorder %s43, %s59
      %p61 = scmp.eq.s32.totalorder %s21, 0
      %p62 = por %p60, %p61
      %s63 = ssub.s32 %s23, %s30
      %s64 = ssub.s32 %s22, %s34
      %s65 = sor.u32 %s63, %s64
      %p66 = scmp.eq.s32.totalorder %s65, 0
      %s68 = sadd.s32 %s67, 1
      %s69 = scalar_select %p66, %s67, %s68
      %p72 = pneg %p66
      %p73 = scmp.eq.s32.totalorder %s15, 1
      %p74 = por %p72, %p73
      %p75 = scmp.ne.s32.totalorder %s67, %s70
      %p76 = scmp.eq.s32.totalorder %s15, 0
      %p77 = por %p75, %p76
      %p78 = scmp.ne.s32.totalorder %s67, %s70
      %p79 = scmp.eq.s32.totalorder %s20, 1
      %p80 = por %p78, %p79
      %p81 = scmp.ne.s32.totalorder %s70, %s71
      %p82 = scmp.eq.s32.totalorder %s20, 0
      %p83 = por %p81, %p82
      %p84 = scmp.ne.s32.totalorder %s70, %s71
      %p85 = scmp.eq.s32.totalorder %s21, 1
      %p86 = por %p84, %p85
      %p88 = scmp.ne.s32.totalorder %s71, %s87
      %p89 = scmp.eq.s32.totalorder %s21, 0
      %p90 = por %p88, %p89
      %s91 = ssub.s32 %s22, %s34
      %p92 = scmp.eq.s32.totalorder %s91, 0
      %s94 = sadd.s32 %s93, 1
      %s95 = scalar_select %p92, %s93, %s94
      %p98 = pneg %p92
      %p99 = scmp.eq.s32.totalorder %s15, 1
      %p100 = por %p98, %p99
      %p101 = scmp.ne.s32.totalorder %s93, %s96
      %p102 = scmp.eq.s32.totalorder %s15, 0
      %p103 = por %p101, %p102
      %p104 = scmp.ne.s32.totalorder %s93, %s96
      %p105 = scmp.eq.s32.totalorder %s20, 1
      %p106 = por %p104, %p105
      %p107 = scmp.ne.s32.totalorder %s96, %s97
      %p108 = scmp.eq.s32.totalorder %s20, 0
      %p109 = por %p107, %p108
      %p110 = scmp.ne.s32.totalorder %s96, %s97
      %p111 = scmp.eq.s32.totalorder %s21, 1
      %p112 = por %p110, %p111
      %p114 = scmp.ne.s32.totalorder %s97, %s113
      %p115 = scmp.eq.s32.totalorder %s21, 0
      %p116 = por %p114, %p115
      %p117 = scmp.le.s32.totalorder 1, %s15
      %p118 = scmp.lt.s32.totalorder %s15, 3
      %p119 = pnand %p117, %p118
      %p120 = pneg %p119
      // Predicated region
      $region9: #{tpu_custom_call.1} parent=5 // pred_check
        _
      $region10: #{tpu_custom_call.1} parent=5 // pred_check_branch
        %122 = sbr.rel (%p119) target = $region12
      $region11: #{tpu_custom_call.1} parent=5 // pred_region
        %s123 = ssub.s32 %s15, 1
      $region12: #{tpu_custom_call.1} parent=5 // pred_fallthru
        _
      %p124 = scmp.lt.s32.totalorder %s15, 2
      // Predicated region
      $region13: #{tpu_custom_call.1} parent=5 // pred_check
        %p125 = pneg %p124
      $region14: #{tpu_custom_call.1} parent=5 // pred_check_branch
        %127 = sbr.rel (%p125) target = $region16
      $region15: #{tpu_custom_call.1} parent=5 // pred_region
        // Predicated region
        $region17: #{tpu_custom_call.1} parent=15 // pred_check
          %p128 = pneg %p49
        $region18: #{tpu_custom_call.1} parent=15 // pred_check_branch
          %130 = sbr.rel (%p128) target = $region20
        $region19: #{tpu_custom_call.1} parent=15 // pred_region
          %s131 = sand.u32 %s39, 1
          %s132 = scalar_lea.sflag [#allocation3], %s131
          %s133 = sand.u32 %s39, 1
          %s134 = smul.addr %s133, 16
          %s135 = scalar_lea.vmem [#allocation2], %s134
          %s136 = smul.u32 4, %s23
          %s138 = ssub.s32 256, 256
          %139 = vsyncadd %s132, %s138
          %s140 = sadd.s32 %s22, %s136
          %s141 = smul.addr %s140, 64
          %s142 = scalar_lea.hbm %s0, %s141
          %s143 = sshll.u32 %s135, 4
          %s144 = int_to_ptr.vmem [resolvable:$true] %s143
          %149 = dma.hbm_to_vmem [thread:$0]  %s142, 256, %s144, %s132, 64, 64, 4
        $region20: #{tpu_custom_call.1} parent=15 // pred_fallthru
          _
        // Predicated region
        $region21: #{tpu_custom_call.1} parent=15 // pred_check
          %p150 = pneg %p77
        $region22: #{tpu_custom_call.1} parent=15 // pred_check_branch
          %152 = sbr.rel (%p150) target = $region24
        $region23: #{tpu_custom_call.1} parent=15 // pred_region
          %s153 = sand.u32 %s67, 1
          %s154 = scalar_lea.sflag [#allocation6], %s153
          %s155 = sand.u32 %s67, 1
          %s156 = smul.addr %s155, 16
          %s157 = scalar_lea.vmem [#allocation5], %s156
          %s158 = smul.u32 4, %s23
          %s160 = ssub.s32 256, 256
          %161 = vsyncadd %s154, %s160
          %s162 = sadd.s32 %s22, %s158
          %s163 = smul.addr %s162, 64
          %s164 = scalar_lea.hbm %s1, %s163
          %s165 = sshll.u32 %s157, 4
          %s166 = int_to_ptr.vmem [resolvable:$true] %s165
          %171 = dma.hbm_to_vmem [thread:$0]  %s164, 256, %s166, %s154, 64, 64, 4
        $region24: #{tpu_custom_call.1} parent=15 // pred_fallthru
          _
      $region16: #{tpu_custom_call.1} parent=5 // pred_fallthru
        _
      %p172 = scmp.le.s32.totalorder 1, %s15
      %p173 = scmp.lt.s32.totalorder %s15, 3
      %p174 = pnand %p172, %p173
      %p175 = pneg %p174
      // Predicated region
      $region25: #{tpu_custom_call.1} parent=5 // pred_check
        _
      $region26: #{tpu_custom_call.1} parent=5 // pred_check_branch
        %177 = sbr.rel (%p174) target = $region28
      $region27: #{tpu_custom_call.1} parent=5 // pred_region
        %s178 = ssub.s32 %s15, 1
        %s179 = sand.u32 %s42, 1
        %s180 = scalar_lea.sflag [#allocation3], %s179
        %s181 = sand.u32 %s42, 1
        %s182 = smul.addr %s181, 16
        %s183 = scalar_lea.vmem [#allocation2], %s182
        // Predicated region
        $region29: #{tpu_custom_call.1} parent=27 // pred_check
          %p184 = pneg %p55
        $region30: #{tpu_custom_call.1} parent=27 // pred_check_branch
          %186 = sbr.rel (%p184) target = $region32
        $region31: #{tpu_custom_call.1} parent=27 // pred_region
          %187 = dma.done %s180, 256
        $region32: #{tpu_custom_call.1} parent=27 // pred_fallthru
          _
        %s188 = sand.u32 %s70, 1
        %s189 = scalar_lea.sflag [#allocation6], %s188
        %s190 = sand.u32 %s70, 1
        %s191 = smul.addr %s190, 16
        %s192 = scalar_lea.vmem [#allocation5], %s191
        // Predicated region
        $region33: #{tpu_custom_call.1} parent=27 // pred_check
          %p193 = pneg %p83
        $region34: #{tpu_custom_call.1} parent=27 // pred_check_branch
          %195 = sbr.rel (%p193) target = $region36
        $region35: #{tpu_custom_call.1} parent=27 // pred_region
          %196 = dma.done %s189, 256
        $region36: #{tpu_custom_call.1} parent=27 // pred_fallthru
          _
        %s197 = sand.u32 %s42, 1
        %s198 = scalar_lea.sflag [#allocation3], %s197
        %s199 = sand.u32 %s42, 1
        %s200 = smul.addr %s199, 16
        %s201 = scalar_lea.vmem [#allocation2], %s200
        %p202 = pneg %p55
        %p203 = pneg %p52
        %s204 = sand.u32 %s70, 1
        %s205 = scalar_lea.sflag [#allocation6], %s204
        %s206 = sand.u32 %s70, 1
        %s207 = smul.addr %s206, 16
        %s208 = scalar_lea.vmem [#allocation5], %s207
        %p209 = pneg %p83
        %p210 = pneg %p80
        %p211 = pneg %p109
        %p212 = pneg %p106
        %s213 = smul.u32 4, %s25
        %s214 = smul.u32 4, %s25
        %p215 = scmp.eq.s32.totalorder %s25, 0
        // Predicated region
        $region37: #{tpu_custom_call.1} parent=27 // pred_check
          %p216 = pneg %p215
        $region38: #{tpu_custom_call.1} parent=27 // pred_check_branch
          %218 = sbr.rel (%p216) target = $region40
        $region39: #{tpu_custom_call.1} parent=27 // pred_region
          %v219 = vlaneseq
          %v220 = vand.u32 %v219, 127
          %vm221 = vcmp.eq.s32.totalorder %v220, 0
          %v222 = vsel %vm221, 0.0, -1e+30
          %vm223 = vcmask 68608
          %224 = vst.msk [vmem:[#allocation7] sm:$0xf] %vm223, %v222
        $region40: #{tpu_custom_call.1} parent=27 // pred_fallthru
          _
        %v225 = vlaneseq
        %v226 = vand.u32 %v225, 127
        %vm227 = vcmp.eq.s32.totalorder %v226, 0
        %v228 = vsel %vm227, -1e+30, 0.0
        %v229 = vld [vmem:[#allocation7] sm:$0xf]
        %v230 = vld [vmem:[%s183] sm:$0xf]
        %v231 = vld [vmem:[%s192] sm:$0xf]
        %vm232 = vcmask 1047624
        %233 = vrot.lane.b32.xlu0 %v229, 9
        %v234 = vpop.permute.xlu0 %233
        %v235 = vsel %vm232, %v234, %v229
        %236 = vrot.lane.b32.xlu0 %v235, 9
        %v237 = vpop.permute.xlu0 %236
        %v238 = vsel %vm232, %v237, %v229
        %240 = vrot.lane.b32.xlu0 %v228, 8
        %v241 = vpop.permute.xlu0 %240
        %v243 = vadd.f32 %v238, %v241
        %v244 = vadd.f32 %v230, %v229
        %246 = vrot.lane.b32.xlu0 %v243, 120
        %v247 = vpop.permute.xlu0 %246
        %v249 = vadd.f32 %v231, %v247
        %v250 = vmax.f32 %v244, %v249
        %v251 = vsub.f32 %v244, %v249
        %vm252 = vcmp.ne.f32.partialorder %v251, %v251
        %v253 = vadd.f32 %v244, %v249
        %v254 = vand.u32 2147483647, %v251
        %v255 = vsub.f32 0.0, %v254
        %v256 = vmul.f32 %v255, 1.442695
        %v257 = vpow.pop %v256
        %v258 = vadd.f32 %v257, 1.0
        %v259 = vlog2.pop %v258
        %v260 = vmul.f32 %v259, 0.6931472
        %v261 = vmul.f32 -0.5, %v257
        %v262 = vadd.f32 %v261, 1.0
        %v263 = vmul.f32 %v262, %v257
        %v264 = vand.u32 2147483647, %v257
        %vm265 = vcmp.lt.f32.partialorder %v264, 0.0004427343
        %v266 = vsel %vm265, %v263, %v260
        %v267 = vadd.f32 %v250, %v266
        %v268 = vsel %vm252, %v253, %v267
        %s269 = scalar_lea.vmem %s183, 4 [#allocation2]
        %v270 = vld [vmem:[%s269] sm:$0xf]
        %s271 = scalar_lea.vmem %s192, 4 [#allocation5]
        %v272 = vld [vmem:[%s271] sm:$0xf]
        %273 = vrot.lane.b32.xlu0 %v268, 9
        %v274 = vpop.permute.xlu0 %273
        %v275 = vsel %vm232, %v274, %v268
        %276 = vrot.lane.b32.xlu0 %v275, 9
        %v277 = vpop.permute.xlu0 %276
        %v278 = vsel %vm232, %v277, %v268
        %v279 = vadd.f32 %v278, %v241
        %v280 = vadd.f32 %v270, %v268
        %282 = vrot.lane.b32.xlu0 %v279, 120
        %v283 = vpop.permute.xlu0 %282
        %v285 = vadd.f32 %v272, %v283
        %v286 = vmax.f32 %v280, %v285
        %v287 = vsub.f32 %v280, %v285
        %vm288 = vcmp.ne.f32.partialorder %v287, %v287
        %v289 = vadd.f32 %v280, %v285
        %v290 = vand.u32 2147483647, %v287
        %v291 = vsub.f32 0.0, %v290
        %v292 = vmul.f32 %v291, 1.442695
        %v293 = vpow.pop %v292
        %v294 = vadd.f32 %v293, 1.0
        %v295 = vlog2.pop %v294
        %v296 = vmul.f32 %v295, 0.6931472
        %v297 = vmul.f32 -0.5, %v293
        %v298 = vadd.f32 %v297, 1.0
        %v299 = vmul.f32 %v298, %v293
        %v300 = vand.u32 2147483647, %v293
        %vm301 = vcmp.lt.f32.partialorder %v300, 0.0004427343
        %v302 = vsel %vm301, %v299, %v296
        %v303 = vadd.f32 %v286, %v302
        %v304 = vsel %vm288, %v289, %v303
        %s305 = scalar_lea.vmem %s183, 8 [#allocation2]
        %v306 = vld [vmem:[%s305] sm:$0xf]
        %s307 = scalar_lea.vmem %s192, 8 [#allocation5]
        %v308 = vld [vmem:[%s307] sm:$0xf]
        %309 = vrot.lane.b32.xlu0 %v304, 9
        %v310 = vpop.permute.xlu0 %309
        %v311 = vsel %vm232, %v310, %v304
        %312 = vrot.lane.b32.xlu0 %v311, 9
        %v313 = vpop.permute.xlu0 %312
        %v314 = vsel %vm232, %v313, %v304
        %v315 = vadd.f32 %v314, %v241
        %v316 = vadd.f32 %v306, %v304
        %318 = vrot.lane.b32.xlu0 %v315, 120
        %v319 = vpop.permute.xlu0 %318
        %v321 = vadd.f32 %v308, %v319
        %v322 = vmax.f32 %v316, %v321
        %v323 = vsub.f32 %v316, %v321
        %vm324 = vcmp.ne.f32.partialorder %v323, %v323
        %v325 = vadd.f32 %v316, %v321
        %v326 = vand.u32 2147483647, %v323
        %v327 = vsub.f32 0.0, %v326
        %v328 = vmul.f32 %v327, 1.442695
        %v329 = vpow.pop %v328
        %v330 = vadd.f32 %v329, 1.0
        %v331 = vlog2.pop %v330
        %v332 = vmul.f32 %v331, 0.6931472
        %v333 = vmul.f32 -0.5, %v329
        %v334 = vadd.f32 %v333, 1.0
        %v335 = vmul.f32 %v334, %v329
        %v336 = vand.u32 2147483647, %v329
        %vm337 = vcmp.lt.f32.partialorder %v336, 0.0004427343
        %v338 = vsel %vm337, %v335, %v332
        %v339 = vadd.f32 %v322, %v338
        %v340 = vsel %vm324, %v325, %v339
        %s341 = scalar_lea.vmem %s183, 12 [#allocation2]
        %v342 = vld [vmem:[%s341] sm:$0xf]
        %s343 = scalar_lea.vmem %s192, 12 [#allocation5]
        %v344 = vld [vmem:[%s343] sm:$0xf]
        %345 = vrot.lane.b32.xlu0 %v340, 9
        %v346 = vpop.permute.xlu0 %345
        %v347 = vsel %vm232, %v346, %v340
        %348 = vrot.lane.b32.xlu0 %v347, 9
        %v349 = vpop.permute.xlu0 %348
        %v350 = vsel %vm232, %v349, %v340
        %v351 = vadd.f32 %v350, %v241
        %v352 = vadd.f32 %v342, %v340
        %354 = vrot.lane.b32.xlu0 %v351, 120
        %v355 = vpop.permute.xlu0 %354
        %v357 = vadd.f32 %v344, %v355
        %v358 = vmax.f32 %v352, %v357
        %v359 = vsub.f32 %v352, %v357
        %vm360 = vcmp.ne.f32.partialorder %v359, %v359
        %v361 = vadd.f32 %v352, %v357
        %v362 = vand.u32 2147483647, %v359
        %v363 = vsub.f32 0.0, %v362
        %v364 = vmul.f32 %v363, 1.442695
        %v365 = vpow.pop %v364
        %v366 = vadd.f32 %v365, 1.0
        %v367 = vlog2.pop %v366
        %v368 = vmul.f32 %v367, 0.6931472
        %v369 = vmul.f32 -0.5, %v365
        %v370 = vadd.f32 %v369, 1.0
        %v371 = vmul.f32 %v370, %v365
        %v372 = vand.u32 2147483647, %v365
        %vm373 = vcmp.lt.f32.partialorder %v372, 0.0004427343
        %v374 = vsel %vm373, %v371, %v368
        %v375 = vadd.f32 %v358, %v374
        %v376 = vsel %vm360, %v361, %v375
        %vm377 = vcmask 68608
        %378 = vst.msk [vmem:[#allocation7] sm:$0xf] %vm377, %v376
        // Predicated region
        $region41: #{tpu_custom_call.1} parent=27 // pred_check
          %p379 = pneg %p106
        $region42: #{tpu_custom_call.1} parent=27 // pred_check_branch
          %381 = sbr.rel (%p379) target = $region44
        $region43: #{tpu_custom_call.1} parent=27 // pred_region
          %s383 = ssub.s32 64, 64
          %384 = vsyncadd [#allocation4], %s383
          %s385 = smul.addr %s24, 64
          %s386 = scalar_lea.hbm %s2, %s385
          %s388 = sshll.u32 [#allocation7], 4
          %s389 = int_to_ptr.vmem [resolvable:$true] %s388
          %391 = dma.vmem_to_hbm [thread:$0]  %s389, 64, %s386, [#allocation4]
        $region44: #{tpu_custom_call.1} parent=27 // pred_fallthru
          _
        // Predicated region
        $region45: #{tpu_custom_call.1} parent=27 // pred_check
          %p392 = pneg %p106
        $region46: #{tpu_custom_call.1} parent=27 // pred_check_branch
          %394 = sbr.rel (%p392) target = $region48
        $region47: #{tpu_custom_call.1} parent=27 // pred_region
          %395 = dma.done [#allocation4], 64
        $region48: #{tpu_custom_call.1} parent=27 // pred_fallthru
          _
      $region28: #{tpu_custom_call.1} parent=5 // pred_fallthru
        _
      %p396 = scmp.le.s32.totalorder 2, %s15
      // Predicated region
      $region49: #{tpu_custom_call.1} parent=5 // pred_check
        %p397 = pneg %p396
      $region50: #{tpu_custom_call.1} parent=5 // pred_check_branch
        %399 = sbr.rel (%p397) target = $region52
      $region51: #{tpu_custom_call.1} parent=5 // pred_region
        %s400 = ssub.s32 %s15, 2
      $region52: #{tpu_custom_call.1} parent=5 // pred_fallthru
        _
    $region6: #{tpu_custom_call.1} parent=1 // loop_footer
      %s19 = sadd.s32 1, %s15
    $region7: #{tpu_custom_call.1} parent=1 // loop_footer_branch
      %14 = sbr.rel target = $region3
    $region8: #{tpu_custom_call.1} parent=1 // loop_exit
      _
    %401 = vsyncpa [#allocation3], 1
    %s402 = scalar_lea.sflag [#allocation3], 1
    %403 = vsyncpa %s402, 1
    %404 = vsyncpa [#allocation6], 1
    %s405 = scalar_lea.sflag [#allocation6], 1
    %406 = vsyncpa %s405, 1
    %407 = vsyncpa [#allocation4], 1
    %s408 = scalar_lea.sflag [#allocation4], 1
    %409 = vsyncpa %s408, 1

</llo_original>
